<compile_context>
chip_gen: v6e
topology: v6e:2x2x1
jax: 0.10.0
libtpu: 0.0.40
codegen_flags: <defaults>
</compile_context>

<pallas_src>
import functools

import jax
import jax.numpy as jnp
from jax.experimental import pallas as pl
from jax.experimental.pallas import tpu as pltpu

ALPHA = 0.1  # default from the PyTorch module

_LANE = 128
_TARGET_TILE_BYTES = 4 * 1024 * 1024   # ~4 MiB per tile (dtype-independent)
_VMEM_LIMIT_BYTES = 32 * 1024 * 1024   # safe on v5e/v6e (128 MiB phys) and v7x (64 MiB)
_SMALL_ROWS = 1024                     # <= this: one full-array block, grid of 1


def _linexp_kernel(x_ref, o_ref, *, alpha):
    # Elementwise: exp(alpha * x) - 1, computed in f32, stored in input dtype.
    x = x_ref[...].astype(jnp.float32)
    y = jnp.exp(alpha * x) - 1.0
    o_ref[...] = y.astype(o_ref.dtype)


def _round_up(v: int, m: int) -> int:
    return ((v + m - 1) // m) * m


def _choose_block_rows(rows: int, itemsize: int) -> int:
    # Dtype-aware sublane multiple: 8 for f32, 16 for bf16/f16, 32 for int8/fp8.
    sub = max(8, 32 // itemsize)
    if rows <= _SMALL_ROWS:
        # Tiny/small input: single block covering the full array (always legal),
        # zero per-step overhead.
        return rows
    # Dtype-aware row cap so each tile is ~4 MiB.
    target_rows = max(sub, (_TARGET_TILE_BYTES // (_LANE * itemsize)) // sub * sub)
    # >= 4 grid steps (>= 2 per TensorCore on v7x) and an even step count so the
    # two v7x TensorCores stay balanced; irrelevant but harmless on v5e/v6e.
    nblocks = max(4, pl.cdiv(rows, target_rows))
    if nblocks % 2:
        nblocks += 1
    return _round_up(pl.cdiv(rows, nblocks), sub)


def linear_exponential(x: jax.Array, alpha: float = ALPHA) -> jax.Array:
    """Applies exp(alpha * x) - 1 elementwise; same shape/dtype as input."""
    orig_shape = x.shape
    n = x.size

    if n == 0 or n % _LANE != 0:
        # Misaligned (or empty) element count: a single fused jnp pass is one
        # HBM read + one write, strictly better than pad + kernel + slice.
        return (jnp.exp(alpha * x.astype(jnp.float32)) - 1.0).astype(x.dtype)

    rows = n // _LANE
    x2d = x.reshape(rows, _LANE)
    itemsize = jnp.dtype(x.dtype).itemsize
    block_rows = _choose_block_rows(rows, itemsize)
    grid = (pl.cdiv(rows, block_rows),)

    kernel = functools.partial(_linexp_kernel, alpha=float(alpha))

    out2d = pl.pallas_call(
        kernel,
        out_shape=jax.ShapeDtypeStruct((rows, _LANE), x.dtype),
        grid_spec=pltpu.PrefetchScalarGridSpec(
            num_scalar_prefetch=0,
            grid=grid,
            in_specs=[pl.BlockSpec((block_rows, _LANE), lambda i: (i, 0))],
            out_specs=pl.BlockSpec((block_rows, _LANE), lambda i: (i, 0)),
        ),
        compiler_params=pltpu.CompilerParams(
            dimension_semantics=("parallel",),
            vmem_limit_bytes=_VMEM_LIMIT_BYTES,
        ),
    )(x2d)

    return out2d.reshape(orig_shape)


if __name__ == "__main__":
    key = jax.random.PRNGKey(0)

    # Small NCHW-style input consistent with "(N, *) any shape".
    x = jax.random.normal(key, (2, 4, 16, 16), dtype=jnp.float32)
    y = jax.block_until_ready(linear_exponential(x, alpha=ALPHA))
    ref = jnp.exp(ALPHA * x) - 1.0
    assert y.shape == x.shape and y.dtype == x.dtype
    assert jnp.allclose(y, ref, atol=1e-6, rtol=1e-6)

    # Mid-size 128-aligned input: exercises the multi-block (even grid) path.
    x_mid = jax.random.normal(jax.random.PRNGKey(2), (2, 4, 128, 256), dtype=jnp.float32)
    y_mid = jax.block_until_ready(linear_exponential(x_mid, alpha=ALPHA))
    assert jnp.allclose(y_mid, jnp.exp(ALPHA * x_mid) - 1.0, atol=1e-6, rtol=1e-6)

    # bf16 input: exercises the dtype-aware (16-row) sublane rounding / f32 compute.
    x_bf = jax.random.normal(jax.random.PRNGKey(3), (4, 8, 32), dtype=jnp.bfloat16)
    y_bf = jax.block_until_ready(linear_exponential(x_bf, alpha=ALPHA))
    ref_bf = (jnp.exp(ALPHA * x_bf.astype(jnp.float32)) - 1.0).astype(jnp.bfloat16)
    assert y_bf.dtype == jnp.bfloat16
    assert jnp.allclose(y_bf.astype(jnp.float32), ref_bf.astype(jnp.float32),
                        atol=1e-2, rtol=1e-2)

    # Non-128-aligned shape: covers the fused jnp fallback path.
    x2 = jax.random.normal(jax.random.PRNGKey(1), (3, 5, 7), dtype=jnp.float32)
    y2 = jax.block_until_ready(linear_exponential(x2, alpha=ALPHA))
    assert jnp.allclose(y2, jnp.exp(ALPHA * x2) - 1.0, atol=1e-6, rtol=1e-6)

    print("KERNEL_OK")
</pallas_src>

<mosaic_0001>
module attributes {stable_mosaic.version = 11 : i64} {
  func.func @_linexp_kernel(%arg0: i32, %arg1: memref<16x128xf32, #tpu.memory_space<vmem>>, %arg2: memref<16x128xf32, #tpu.memory_space<vmem>>) attributes {dimension_semantics = [#tpu.dimension_semantics<parallel>], iteration_bounds = array<i64: 1>, scalar_prefetch = 0 : i64, scratch_operands = 0 : i64, tpu.core_type = #tpu.core_type<tc>, window_params = [{transform_indices = @transform_0, window_bounds = array<i64: 16, 128>}, {transform_indices = @transform_1, window_bounds = array<i64: 16, 128>}]} {
    %c0 = arith.constant 0 : index
    %c0_0 = arith.constant 0 : index
    %0 = vector.load %arg1[%c0, %c0_0] : memref<16x128xf32, #tpu.memory_space<vmem>>, vector<16x128xf32>
    %cst = arith.constant 1.000000e-01 : f32
    %1 = vector.broadcast %cst : f32 to vector<16x128xf32>
    %2 = arith.mulf %1, %0 : vector<16x128xf32>
    %3 = math.exp %2 : vector<16x128xf32>
    %cst_1 = arith.constant 1.000000e+00 : f32
    %4 = vector.broadcast %cst_1 : f32 to vector<16x128xf32>
    %5 = arith.subf %3, %4 : vector<16x128xf32>
    %c0_2 = arith.constant 0 : index
    %c0_3 = arith.constant 0 : index
    %6 = vector.load %arg2[%c0_2, %c0_3] : memref<16x128xf32, #tpu.memory_space<vmem>>, vector<16x128xf32>
    tpu.vector_store %arg2[%c0_2, %c0_3], %5 {strides = array<i32>} : memref<16x128xf32, #tpu.memory_space<vmem>>, vector<16x128xf32>,
    return
  }
  func.func @transform_0(%arg0: i32) -> (i32, i32) {
    %c0_i32 = arith.constant 0 : i32
    %c0_i32_0 = arith.constant 0 : i32
    return %arg0, %c0_i32 : i32, i32
  }
  func.func @transform_1(%arg0: i32) -> (i32, i32) {
    %c0_i32 = arith.constant 0 : i32
    %c0_i32_0 = arith.constant 0 : i32
    return %arg0, %c0_i32 : i32, i32
  }
}

</mosaic_0001>

<llo_original>
// kernel: tpu_custom_call.1
$region0: #{tpu_custom_call.1}
  #allocation0 [shape = 'u32[]', space=smem, size = 0x4, offset = 0x4, fixed_abs, tag = 'smem constant byte address 0x4 - core index']
  #allocation1 [shape = 'u32[144,128]{1,0:T(1,128)}', space=vmem, size = 0x12000, scoped, tag = 'internal scratch']
  %s0 = inlined_call_operand.hbm [shape: f32[16,128], index: 0, kind: input, shape index: {}]
  %s1 = inlined_call_operand.hbm [shape: f32[16,128], index: 1, kind: output, shape index: {}]
  %s2 = sld [smem:[#allocation0]]
  $region18: #{tpu_custom_call.1} parent=0
    _
  %s4 = ssub.s32 1, %s2
  %s5 = scalar_select 0, %s4, %s2
  $region1: #{tpu_custom_call.1} parent=0
    #allocation2 [shape = 'u8[8192]{0}', space=vmem, size = 0x2000, scoped, tag = 'input window, operand 0, single buffered']
    #allocation3 [shape = 's32[1]{0}', space=sflag, size = 0x4, scoped, tag = 'scoped memory for tpu_custom_call.1']
    #allocation4 [shape = 's32[1]{0}', space=sflag, size = 0x4, scoped, tag = 'scoped memory for tpu_custom_call.1']
    #allocation5 [shape = 'u8[8192]{0}', space=vmem, size = 0x2000, scoped, tag = 'output window, operand 0, single buffered']
    %6 = vsyncpa [#allocation3], 0
    %7 = vsyncpa [#allocation4], 0
    // Predicated region
    $region2: #{tpu_custom_call.1} parent=1 // pred_check
      _
    $region3: #{tpu_custom_call.1} parent=1 // pred_check_branch
      %9 = sbr.rel (0) target = $region5
    $region4: #{tpu_custom_call.1} parent=1 // pred_region
      %s11 = ssub.s32 256, 256
      %12 = vsyncadd [#allocation3], %s11
      %s13 = sshll.u32 [#allocation2], 4
      %s14 = int_to_ptr.vmem [resolvable:$true] %s13
      %19 = dma.hbm_to_vmem [thread:$0]  %s0, 256, %s14, [#allocation3], 128, 128, 8
    $region5: #{tpu_custom_call.1} parent=1 // pred_fallthru
      _
    // Predicated region
    $region6: #{tpu_custom_call.1} parent=1 // pred_check
      _
    $region7: #{tpu_custom_call.1} parent=1 // pred_check_branch
      %21 = sbr.rel (0) target = $region9
    $region8: #{tpu_custom_call.1} parent=1 // pred_region
      %22 = dma.done [#allocation3], 256
    $region9: #{tpu_custom_call.1} parent=1 // pred_fallthru
      _
    %v23 = vld [vmem:[#allocation2] sm:$0xff]
    %v24 = vld [vmem:[#allocation2 + $0x8] sm:$0xff]
    %v25 = vmul.f32 %v23, 0.1
    %v26 = vmul.f32 %v24, 0.1
    %v27 = vmul.f32 %v25, 1.442695
    %v28 = vpow.pop %v27
    %v29 = vmul.f32 %v26, 1.442695
    %v30 = vpow.pop %v29
    %v31 = vsub.f32 %v28, 1.0
    %v32 = vsub.f32 %v30, 1.0
    %33 = vst [vmem:[#allocation5] sm:$0xff] %v31
    %34 = vst [vmem:[#allocation5 + $0x8] sm:$0xff] %v32
    // Predicated region
    $region10: #{tpu_custom_call.1} parent=1 // pred_check
      _
    $region11: #{tpu_custom_call.1} parent=1 // pred_check_branch
      %36 = sbr.rel (0) target = $region13
    $region12: #{tpu_custom_call.1} parent=1 // pred_region
      %s38 = ssub.s32 256, 256
      %39 = vsyncadd [#allocation4], %s38
      %s40 = sshll.u32 [#allocation5], 4
      %s41 = int_to_ptr.vmem [resolvable:$true] %s40
      %46 = dma.vmem_to_hbm [thread:$0]  %s41, 256, %s1, [#allocation4], 128, 128, 8
    $region13: #{tpu_custom_call.1} parent=1 // pred_fallthru
      _
    // Predicated region
    $region14: #{tpu_custom_call.1} parent=1 // pred_check
      _
    $region15: #{tpu_custom_call.1} parent=1 // pred_check_branch
      %48 = sbr.rel (0) target = $region17
    $region16: #{tpu_custom_call.1} parent=1 // pred_region
      %49 = dma.done [#allocation4], 256
    $region17: #{tpu_custom_call.1} parent=1 // pred_fallthru
      _
    %50 = vsyncpa [#allocation3], 1
    %51 = vsyncpa [#allocation4], 1

</llo_original>
